<compile_context>
chip_gen: v7x
topology: tpu7x:2x2x1
jax: 0.10.0
libtpu: 0.0.40
codegen_flags: <defaults>
</compile_context>

<pallas_src>
import functools
import math

import jax
import jax.numpy as jnp
from jax.experimental import pallas as pl
from jax.experimental.pallas import tpu as pltpu


def _round_up(x: int, n: int) -> int:
    return ((x + n - 1) // n) * n


def make_arcface_kernel(s: float, m: float, tile_c: int, mxu_dtype):
    cos_m = math.cos(m)
    sin_m = math.sin(m)
    th = math.cos(math.pi - m)
    mm = math.sin(math.pi - m) * m
    eps = 1e-12  # F.normalize default eps

    def kernel(xn_ref, w_ref, lab_ref, o_ref):
        j = pl.program_id(0)

        xn = xn_ref[...]                            # (Bp, Dp) f32, pre-normalized
        w = w_ref[...].astype(jnp.float32)          # (Ct, Dp) weight tile
        lab = lab_ref[...]                          # (Bp, 1) int32 (padded rows = -1)

        # Row-normalize this weight tile: rsqrt (EUP) + broadcast multiply.
        # sqrt(max(sumsq, eps^2)) == max(||w||, eps)  (F.normalize semantics).
        w_sumsq = jnp.sum(w * w, axis=-1, keepdims=True)            # (Ct, 1)
        inv_wn = jax.lax.rsqrt(jnp.maximum(w_sumsq, eps * eps))     # (Ct, 1)
        wn = w * inv_wn                                             # (Ct, Dp)

        # cosine = xn @ wn^T on the MXU, contracting the last (lane) dims of
        # both operands -- no explicit transpose of the weight tile.
        cosine = jax.lax.dot_general(
            xn.astype(mxu_dtype),
            wn.astype(mxu_dtype),
            dimension_numbers=(((1,), (1,)), ((), ())),
            preferred_element_type=jnp.float32,
        )                                                           # (Bp, Ct)

        # Margin: phi = cos(theta + m), with the easy_margin=False fallback.
        sine = jnp.sqrt(jnp.clip(1.0 - cosine * cosine, 0.0, 1.0))
        phi = cosine * cos_m - sine * sin_m
        phi = jnp.where(cosine > th, phi, cosine - mm)

        # scatter_(1, label, 1) blend == single select on the global column id.
        # TODO(synk): optionally gate the sine/phi epilogue per C tile using
        # scalar-prefetched labels (pl.when) -- skipped; epilogue is not the
        # bottleneck for this memory-bound kernel.
        bp, ct = cosine.shape
        col = jax.lax.broadcasted_iota(jnp.int32, (bp, ct), 1) + j * tile_c
        out = jnp.where(col == lab, phi, cosine) * s
        o_ref[...] = out.astype(o_ref.dtype)

    return kernel


@functools.partial(jax.jit, static_argnames=("s", "m", "tile_c", "mxu_dtype"))
def arcface_forward(x, weight, label, *, s=30.0, m=0.5, tile_c=512,
                    mxu_dtype=jnp.float32):
    """ArcFace forward.

    x:      (B, in_features)   float
    weight: (out_features, in_features) float
    label:  (B,)               int
    Returns (B, out_features) float32, matching the PyTorch module
    (easy_margin=False, bias=False).
    """
    B, D = x.shape
    C, D2 = weight.shape
    assert D == D2
    eps = 1e-12

    # Hoist F.normalize(x) out of the per-C-tile loop: done once here instead
    # of once per weight tile inside the kernel.
    x = x.astype(jnp.float32)
    x_sumsq = jnp.sum(x * x, axis=1, keepdims=True)
    xn = x * jax.lax.rsqrt(jnp.maximum(x_sumsq, eps * eps))

    # Lane-dense padding: contraction dim D and class dim C to multiples of
    # 128 (full-width MXU passes, unmasked vector stores); batch to 8.
    Dp = _round_up(D, 128)
    Bp = _round_up(B, 8)
    Ct = min(int(tile_c), _round_up(C, 128))   # tile_c must be a multiple of 128
    Cp = _round_up(C, Ct)

    xn_p = jnp.zeros((Bp, Dp), jnp.float32).at[:B, :D].set(xn)
    w_p = jnp.zeros((Cp, Dp), jnp.float32).at[:C, :D].set(weight.astype(jnp.float32))
    lab_p = jnp.full((Bp, 1), -1, jnp.int32).at[:B, 0].set(label.astype(jnp.int32))

    kernel = make_arcface_kernel(float(s), float(m), Ct, mxu_dtype)

    out_padded = pl.pallas_call(
        kernel,
        out_shape=jax.ShapeDtypeStruct((Bp, Cp), jnp.float32),
        grid_spec=pltpu.PrefetchScalarGridSpec(
            num_scalar_prefetch=0,
            grid=(Cp // Ct,),
            in_specs=[
                # Resident across all C tiles (constant block index -> 1 DMA).
                pl.BlockSpec((Bp, Dp), lambda j: (0, 0)),
                # Streamed, double-buffered weight tiles.
                pl.BlockSpec((Ct, Dp), lambda j: (j, 0)),
                # Tiny resident label block.
                pl.BlockSpec((Bp, 1), lambda j: (0, 0)),
            ],
            out_specs=pl.BlockSpec((Bp, Ct), lambda j: (0, j)),
        ),
        compiler_params=pltpu.CompilerParams(
            # Independent C tiles -> shard across TensorCores on v7x.
            dimension_semantics=("parallel",),
            # Safe on every generation (v7x has 64 MiB physical VMEM). Raise
            # (and grow tile_c) on v5e/v6e (128 MiB) for bigger streamed tiles.
            vmem_limit_bytes=32 * 1024 * 1024,
        ),
    )(xn_p, w_p, lab_p)

    return out_padded[:B, :C]


def init_arcface_weight(key, out_features, in_features):
    # kaiming_uniform_(a=sqrt(5)) on (out, in) == U(-1/sqrt(fan_in), 1/sqrt(fan_in))
    bound = 1.0 / math.sqrt(in_features)
    return jax.random.uniform(
        key, (out_features, in_features), jnp.float32, minval=-bound, maxval=bound
    )


if __name__ == "__main__":
    in_features = 32
    out_features = 128
    batch = 8

    key = jax.random.PRNGKey(0)
    kx, kw, kl = jax.random.split(key, 3)

    x = jax.random.normal(kx, (batch, in_features), jnp.float32)
    weight = init_arcface_weight(kw, out_features, in_features)
    label = jax.random.randint(kl, (batch,), 0, out_features, jnp.int32)

    out = arcface_forward(x, weight, label, s=30.0, m=0.5)
    out = jax.block_until_ready(out)

    # Pure-JAX reference (same math as the PyTorch module).
    def ref(x, w, label, s=30.0, m=0.5):
        eps = 1e-12
        xn = x / jnp.maximum(jnp.linalg.norm(x, axis=1, keepdims=True), eps)
        wn = w / jnp.maximum(jnp.linalg.norm(w, axis=1, keepdims=True), eps)
        cosine = xn @ wn.T
        sine = jnp.sqrt(jnp.clip(1.0 - cosine**2, 0.0, 1.0))
        phi = cosine * math.cos(m) - sine * math.sin(m)
        phi = jnp.where(cosine > math.cos(math.pi - m), phi,
                        cosine - math.sin(math.pi - m) * m)
        one_hot = jax.nn.one_hot(label, cosine.shape[1], dtype=jnp.float32)
        return (one_hot * phi + (1.0 - one_hot) * cosine) * s

    expected = ref(x, weight, label)
    assert out.shape == (batch, out_features)
    assert jnp.allclose(out, expected, atol=1e-4, rtol=1e-4), (
        float(jnp.max(jnp.abs(out - expected))))

    print("KERNEL_OK")
</pallas_src>

<mosaic_0001>
module attributes {stable_mosaic.version = 11 : i64} {
  func.func @kernel(%arg0: i32, %arg1: memref<8x128xf32, #tpu.memory_space<vmem>>, %arg2: memref<128x128xf32, #tpu.memory_space<vmem>>, %arg3: memref<8x1xi32, #tpu.memory_space<vmem>>, %arg4: memref<8x128xf32, #tpu.memory_space<vmem>>) attributes {dimension_semantics = [#tpu.dimension_semantics<parallel>], iteration_bounds = array<i64: 1>, scalar_prefetch = 0 : i64, scratch_operands = 0 : i64, tpu.core_type = #tpu.core_type<tc>, window_params = [{pipeline_mode = #tpu.pipeline_mode<synchronous>, transform_indices = @transform_0, window_bounds = array<i64: 8, 128>}, {transform_indices = @transform_1, window_bounds = array<i64: 128, 128>}, {pipeline_mode = #tpu.pipeline_mode<synchronous>, transform_indices = @transform_2, window_bounds = array<i64: 8, 1>}, {transform_indices = @transform_3, window_bounds = array<i64: 8, 128>}]} {
    %c0 = arith.constant 0 : index
    %c0_0 = arith.constant 0 : index
    %0 = vector.load %arg1[%c0, %c0_0] : memref<8x128xf32, #tpu.memory_space<vmem>>, vector<8x128xf32>
    %c0_1 = arith.constant 0 : index
    %c0_2 = arith.constant 0 : index
    %1 = vector.load %arg2[%c0_1, %c0_2] : memref<128x128xf32, #tpu.memory_space<vmem>>, vector<128x128xf32>
    %c0_3 = arith.constant 0 : index
    %c0_4 = arith.constant 0 : index
    %2 = vector.load %arg3[%c0_3, %c0_4] : memref<8x1xi32, #tpu.memory_space<vmem>>, vector<8x1xi32>
    %3 = arith.mulf %1, %1 : vector<128x128xf32>
    %cst = arith.constant dense<0.000000e+00> : vector<128xf32>
    %4 = vector.multi_reduction <add>, %3, %cst [1] : vector<128x128xf32> to vector<128xf32>
    %5 = vector.shape_cast %4 : vector<128xf32> to vector<128x1xf32>
    %cst_5 = arith.constant 1.000000e-24 : f32
    %6 = vector.broadcast %cst_5 : f32 to vector<128x1xf32>
    %7 = arith.maximumf %5, %6 : vector<128x1xf32>
    %8 = math.rsqrt %7 : vector<128x1xf32>
    %9 = vector.broadcast %8 : vector<128x1xf32> to vector<128x128xf32>
    %10 = arith.mulf %1, %9 : vector<128x128xf32>
    %cst_6 = arith.constant dense<0.000000e+00> : vector<8x128xf32>
    %11 = tpu.matmul %0, %10, %cst_6 {dimension_numbers = #tpu.dot_dimension_numbers<[1], [1], [0], [0], [0, 0, 1, 0], [], []>} : vector<8x128xf32>, vector<128x128xf32>, vector<8x128xf32> -> vector<8x128xf32>
    %12 = arith.mulf %11, %11 : vector<8x128xf32>
    %cst_7 = arith.constant 1.000000e+00 : f32
    %13 = vector.broadcast %cst_7 : f32 to vector<8x128xf32>
    %14 = arith.subf %13, %12 : vector<8x128xf32>
    %cst_8 = arith.constant 0.000000e+00 : f32
    %cst_9 = arith.constant 1.000000e+00 : f32
    %15 = vector.broadcast %cst_8 : f32 to vector<8x128xf32>
    %16 = arith.maximumf %15, %14 : vector<8x128xf32>
    %17 = vector.broadcast %cst_9 : f32 to vector<8x128xf32>
    %18 = arith.minimumf %17, %16 : vector<8x128xf32>
    %19 = math.sqrt %18 : vector<8x128xf32>
    %cst_10 = arith.constant 0.87758255 : f32
    %20 = vector.broadcast %cst_10 : f32 to vector<8x128xf32>
    %21 = arith.mulf %11, %20 : vector<8x128xf32>
    %cst_11 = arith.constant 0.47942555 : f32
    %22 = vector.broadcast %cst_11 : f32 to vector<8x128xf32>
    %23 = arith.mulf %19, %22 : vector<8x128xf32>
    %24 = arith.subf %21, %23 : vector<8x128xf32>
    %cst_12 = arith.constant -0.87758255 : f32
    %25 = vector.broadcast %cst_12 : f32 to vector<8x128xf32>
    %26 = arith.cmpf ogt, %11, %25 : vector<8x128xf32>
    %cst_13 = arith.constant 0.239712775 : f32
    %27 = vector.broadcast %cst_13 : f32 to vector<8x128xf32>
    %28 = arith.subf %11, %27 : vector<8x128xf32>
    %29 = arith.select %26, %24, %28 : vector<8x128xi1>, vector<8x128xf32>
    %30 = tpu.iota {dimensions = array<i32: 1>} : vector<8x128xi32>
    %c128_i32 = arith.constant 128 : i32
    %31 = arith.muli %arg0, %c128_i32 : i32
    %32 = vector.broadcast %31 : i32 to vector<8x128xi32>
    %33 = arith.addi %30, %32 : vector<8x128xi32>
    %34 = vector.broadcast %2 : vector<8x1xi32> to vector<8x128xi32>
    %35 = arith.cmpi eq, %33, %34 : vector<8x128xi32>
    %36 = arith.select %35, %29, %11 : vector<8x128xi1>, vector<8x128xf32>
    %cst_14 = arith.constant 3.000000e+01 : f32
    %37 = vector.broadcast %cst_14 : f32 to vector<8x128xf32>
    %38 = arith.mulf %36, %37 : vector<8x128xf32>
    %c0_15 = arith.constant 0 : index
    %c0_16 = arith.constant 0 : index
    %39 = vector.load %arg4[%c0_15, %c0_16] : memref<8x128xf32, #tpu.memory_space<vmem>>, vector<8x128xf32>
    tpu.vector_store %arg4[%c0_15, %c0_16], %38 {strides = array<i32>} : memref<8x128xf32, #tpu.memory_space<vmem>>, vector<8x128xf32>,
    return
  }
  func.func @transform_0(%arg0: i32) -> (i32, i32) {
    %c0_i32 = arith.constant 0 : i32
    %c0_i32_0 = arith.constant 0 : i32
    %c0_i32_1 = arith.constant 0 : i32
    return %c0_i32, %c0_i32_0 : i32, i32
  }
  func.func @transform_1(%arg0: i32) -> (i32, i32) {
    %c0_i32 = arith.constant 0 : i32
    %c0_i32_0 = arith.constant 0 : i32
    return %arg0, %c0_i32 : i32, i32
  }
  func.func @transform_2(%arg0: i32) -> (i32, i32) {
    %c0_i32 = arith.constant 0 : i32
    %c0_i32_0 = arith.constant 0 : i32
    %c0_i32_1 = arith.constant 0 : i32
    return %c0_i32, %c0_i32_0 : i32, i32
  }
  func.func @transform_3(%arg0: i32) -> (i32, i32) {
    %c0_i32 = arith.constant 0 : i32
    %c0_i32_0 = arith.constant 0 : i32
    return %c0_i32, %arg0 : i32, i32
  }
}

</mosaic_0001>

<llo_original>
// kernel: arcface_forward.1
$region0: #{arcface_forward.1}
  #allocation0 [shape = 'u32[]', space=smem, size = 0x4, offset = 0x4, fixed_abs, tag = 'smem constant byte address 0x4 - core index']
  #allocation1 [shape = 'u32[144,128]{1,0:T(1,128)}', space=vmem, size = 0x12000, scoped, tag = 'internal scratch']
  %s0 = inlined_call_operand.vmem [shape: f32[8,128], index: 0, kind: input, shape index: {}]
  %s1 = inlined_call_operand.vmem [shape: f32[128,128], index: 1, kind: input, shape index: {}]
  %s2 = inlined_call_operand.vmem [shape: s32[8,1], index: 2, kind: input, shape index: {}]
  %s3 = inlined_call_operand.hbm [shape: f32[8,128], index: 3, kind: output, shape index: {}]
  %s4 = sld [smem:[#allocation0]]
  $region22: #{arcface_forward.1} parent=0
    _
  %s6 = ssub.s32 1, %s4
  %s7 = scalar_select 0, %s6, %s4
  $region1: #{arcface_forward.1} parent=0
    #allocation2 [shape = 'u8[4096]{0}', space=vmem, size = 0x1000, scoped, tag = 'output window, operand 0, single buffered']
    #allocation3 [shape = 's32[1]{0}', space=sflag, size = 0x4, scoped, tag = 'scoped memory for arcface_forward.1']
    %8 = vsyncpa [#allocation3], 0
    // Predicated region
    $region2: #{arcface_forward.1} parent=1 // pred_check
      _
    $region3: #{arcface_forward.1} parent=1 // pred_check_branch
      %10 = sbr.rel (0) target = $region5
    $region4: #{arcface_forward.1} parent=1 // pred_region
      _
    $region5: #{arcface_forward.1} parent=1 // pred_fallthru
      _
    // Predicated region
    $region6: #{arcface_forward.1} parent=1 // pred_check
      _
    $region7: #{arcface_forward.1} parent=1 // pred_check_branch
      %12 = sbr.rel (0) target = $region9
    $region8: #{arcface_forward.1} parent=1 // pred_region
      _
    $region9: #{arcface_forward.1} parent=1 // pred_fallthru
      _
    // Predicated region
    $region10: #{arcface_forward.1} parent=1 // pred_check
      _
    $region11: #{arcface_forward.1} parent=1 // pred_check_branch
      %14 = sbr.rel (0) target = $region13
    $region12: #{arcface_forward.1} parent=1 // pred_region
      _
    $region13: #{arcface_forward.1} parent=1 // pred_fallthru
      _
    %v15 = vld [vmem:[%s0] sm:$0xff]
    %v16 = vld [vmem:[%s1] sm:$0xff]
    %v17 = vld [vmem:[%s1 + $0x8] sm:$0xff]
    %v18 = vld [vmem:[%s1 + $0x10] sm:$0xff]
    %v19 = vld [vmem:[%s1 + $0x18] sm:$0xff]
    %v20 = vld [vmem:[%s1 + $0x20] sm:$0xff]
    %v21 = vld [vmem:[%s1 + $0x28] sm:$0xff]
    %v22 = vld [vmem:[%s1 + $0x30] sm:$0xff]
    %v23 = vld [vmem:[%s1 + $0x38] sm:$0xff]
    %v24 = vld [vmem:[%s1 + $0x40] sm:$0xff]
    %v25 = vld [vmem:[%s1 + $0x48] sm:$0xff]
    %v26 = vld [vmem:[%s1 + $0x50] sm:$0xff]
    %v27 = vld [vmem:[%s1 + $0x58] sm:$0xff]
    %v28 = vld [vmem:[%s1 + $0x60] sm:$0xff]
    %v29 = vld [vmem:[%s1 + $0x68] sm:$0xff]
    %v30 = vld [vmem:[%s1 + $0x70] sm:$0xff]
    %v31 = vld [vmem:[%s1 + $0x78] sm:$0xff]
    %v32 = vld [vmem:[%s2] sm:$0xff]
    %v33 = vmul.f32 %v16, %v16
    %v34 = vmul.f32 %v17, %v17
    %v35 = vmul.f32 %v18, %v18
    %v36 = vmul.f32 %v19, %v19
    %v37 = vmul.f32 %v20, %v20
    %v38 = vmul.f32 %v21, %v21
    %v39 = vmul.f32 %v22, %v22
    %v40 = vmul.f32 %v23, %v23
    %v41 = vmul.f32 %v24, %v24
    %v42 = vmul.f32 %v25, %v25
    %v43 = vmul.f32 %v26, %v26
    %v44 = vmul.f32 %v27, %v27
    %v45 = vmul.f32 %v28, %v28
    %v46 = vmul.f32 %v29, %v29
    %v47 = vmul.f32 %v30, %v30
    %v48 = vmul.f32 %v31, %v31
    %49 = vadd.xlane.f32.xlu0 %v33
    %v50 = vpop.xlane.xlu0 %49
    %51 = vadd.xlane.f32.xlu0 %v34
    %v52 = vpop.xlane.xlu0 %51
    %53 = vadd.xlane.f32.xlu0 %v35
    %v54 = vpop.xlane.xlu0 %53
    %55 = vadd.xlane.f32.xlu0 %v36
    %v56 = vpop.xlane.xlu0 %55
    %57 = vadd.xlane.f32.xlu0 %v37
    %v58 = vpop.xlane.xlu0 %57
    %59 = vadd.xlane.f32.xlu0 %v38
    %v60 = vpop.xlane.xlu0 %59
    %61 = vadd.xlane.f32.xlu0 %v39
    %v62 = vpop.xlane.xlu0 %61
    %63 = vadd.xlane.f32.xlu0 %v40
    %v64 = vpop.xlane.xlu0 %63
    %65 = vadd.xlane.f32.xlu0 %v41
    %v66 = vpop.xlane.xlu0 %65
    %67 = vadd.xlane.f32.xlu0 %v42
    %v68 = vpop.xlane.xlu0 %67
    %69 = vadd.xlane.f32.xlu0 %v43
    %v70 = vpop.xlane.xlu0 %69
    %71 = vadd.xlane.f32.xlu0 %v44
    %v72 = vpop.xlane.xlu0 %71
    %73 = vadd.xlane.f32.xlu0 %v45
    %v74 = vpop.xlane.xlu0 %73
    %75 = vadd.xlane.f32.xlu0 %v46
    %v76 = vpop.xlane.xlu0 %75
    %77 = vadd.xlane.f32.xlu0 %v47
    %v78 = vpop.xlane.xlu0 %77
    %79 = vadd.xlane.f32.xlu0 %v48
    %v80 = vpop.xlane.xlu0 %79
    %v81 = vmax.f32 %v50, 1e-24
    %v82 = vmax.f32 %v52, 1e-24
    %v83 = vmax.f32 %v54, 1e-24
    %v84 = vmax.f32 %v56, 1e-24
    %v85 = vmax.f32 %v58, 1e-24
    %v86 = vmax.f32 %v60, 1e-24
    %v87 = vmax.f32 %v62, 1e-24
    %v88 = vmax.f32 %v64, 1e-24
    %v89 = vmax.f32 %v66, 1e-24
    %v90 = vmax.f32 %v68, 1e-24
    %v91 = vmax.f32 %v70, 1e-24
    %v92 = vmax.f32 %v72, 1e-24
    %v93 = vmax.f32 %v74, 1e-24
    %v94 = vmax.f32 %v76, 1e-24
    %v95 = vmax.f32 %v78, 1e-24
    %v96 = vmax.f32 %v80, 1e-24
    %v97 = vrsqrt.pop %v81
    %v98 = vrsqrt.pop %v82
    %v99 = vrsqrt.pop %v83
    %v100 = vrsqrt.pop %v84
    %v101 = vrsqrt.pop %v85
    %v102 = vrsqrt.pop %v86
    %v103 = vrsqrt.pop %v87
    %v104 = vrsqrt.pop %v88
    %v105 = vrsqrt.pop %v89
    %v106 = vrsqrt.pop %v90
    %v107 = vrsqrt.pop %v91
    %v108 = vrsqrt.pop %v92
    %v109 = vrsqrt.pop %v93
    %v110 = vrsqrt.pop %v94
    %v111 = vrsqrt.pop %v95
    %v112 = vrsqrt.pop %v96
    %v113 = vmul.f32 %v16, %v97
    %v114 = vmul.f32 %v17, %v98
    %v115 = vmul.f32 %v18, %v99
    %v116 = vmul.f32 %v19, %v100
    %v117 = vmul.f32 %v20, %v101
    %v118 = vmul.f32 %v21, %v102
    %v119 = vmul.f32 %v22, %v103
    %v120 = vmul.f32 %v23, %v104
    %v121 = vmul.f32 %v24, %v105
    %v122 = vmul.f32 %v25, %v106
    %v123 = vmul.f32 %v26, %v107
    %v124 = vmul.f32 %v27, %v108
    %v125 = vmul.f32 %v28, %v109
    %v126 = vmul.f32 %v29, %v110
    %v127 = vmul.f32 %v30, %v111
    %v128 = vmul.f32 %v31, %v112
    %129 = vmatprep.subr.mxu0 0.0
    %130 = vmatpush1.xpose.msra.mxu0 %v113
    %131 = vmatprep.subr.mxu0 0.0
    %132 = vmatpush1.xpose.msra.mxu0 %v114
    %133 = vmatprep.subr.mxu0 0.0
    %134 = vmatpush1.xpose.msra.mxu0 %v115
    %135 = vmatprep.subr.mxu0 0.0
    %136 = vmatpush1.xpose.msra.mxu0 %v116
    %137 = vmatprep.subr.mxu0 0.0
    %138 = vmatpush1.xpose.msra.mxu0 %v117
    %139 = vmatprep.subr.mxu0 0.0
    %140 = vmatpush1.xpose.msra.mxu0 %v118
    %141 = vmatprep.subr.mxu0 0.0
    %142 = vmatpush1.xpose.msra.mxu0 %v119
    %143 = vmatprep.subr.mxu0 0.0
    %144 = vmatpush1.xpose.msra.mxu0 %v120
    %145 = vmatprep.subr.mxu0 0.0
    %146 = vmatpush1.xpose.msra.mxu0 %v121
    %147 = vmatprep.subr.mxu0 0.0
    %148 = vmatpush1.xpose.msra.mxu0 %v122
    %149 = vmatprep.subr.mxu0 0.0
    %150 = vmatpush1.xpose.msra.mxu0 %v123
    %151 = vmatprep.subr.mxu0 0.0
    %152 = vmatpush1.xpose.msra.mxu0 %v124
    %153 = vmatprep.subr.mxu0 0.0
    %154 = vmatpush1.xpose.msra.mxu0 %v125
    %155 = vmatprep.subr.mxu0 0.0
    %156 = vmatpush1.xpose.msra.mxu0 %v126
    %157 = vmatprep.subr.mxu0 0.0
    %158 = vmatpush1.xpose.msra.mxu0 %v127
    %159 = vmatprep.subr.mxu0 0.0
    %160 = vmatpush1.xpose.msra.mxu0 %v128
    %161 = vmatprep.subr.mxu0 0.0
    %162 = vmatpush1.xpose.msra.mxu0 0.0
    %163 = vmatprep.subr.mxu0 0.0
    %164 = vmatpush1.xpose.msra.mxu0 0.0
    %165 = vmatprep.subr.mxu0 0.0
    %166 = vmatpush1.xpose.msra.mxu0 0.0
    %167 = vmatprep.subr.mxu0 0.0
    %168 = vmatpush1.xpose.msra.mxu0 0.0
    %169 = vmatprep.subr.mxu0 0.0
    %170 = vmatpush1.xpose.msra.mxu0 0.0
    %171 = vmatprep.subr.mxu0 0.0
    %172 = vmatpush1.xpose.msra.mxu0 0.0
    %173 = vmatprep.subr.mxu0 0.0
    %174 = vmatpush1.xpose.msra.mxu0 0.0
    %175 = vmatprep.subr.mxu0 0.0
    %176 = vmatpush1.xpose.msra.mxu0 0.0
    %177 = vmatprep.subr.mxu0 0.0
    %178 = vmatpush1.xpose.msra.mxu0 0.0
    %179 = vmatprep.subr.mxu0 0.0
    %180 = vmatpush1.xpose.msra.mxu0 0.0
    %181 = vmatprep.subr.mxu0 0.0
    %182 = vmatpush1.xpose.msra.mxu0 0.0
    %183 = vmatprep.subr.mxu0 0.0
    %184 = vmatpush1.xpose.msra.mxu0 0.0
    %185 = vmatprep.subr.mxu0 0.0
    %186 = vmatpush1.xpose.msra.mxu0 0.0
    %187 = vmatprep.subr.mxu0 0.0
    %188 = vmatpush1.xpose.msra.mxu0 0.0
    %189 = vmatprep.subr.mxu0 0.0
    %190 = vmatpush1.xpose.msra.mxu0 0.0
    %191 = vmatprep.subr.mxu0 0.0
    %192 = vmatpush1.xpose.msra.mxu0 0.0
    %193 = vmatprep.mubr.f32.mxu0 0.0
    %194 = vmatmul.mubr.f32.gmra.mrb[0].mxu0 %v15
    %v195 = vpop.f32.mrb[0].mxu0
    %v196 = vadd.f32 0.0, %v195
    %v197 = vpop.f32.mrb[0].mxu0
    %198 = vdwg.mxu0
    %v199 = vmul.f32 %v196, %v196
    %v200 = vsub.f32 1.0, %v199
    %v201 = vmax.f32 %v200, 0.0
    %v202 = vmin.f32 %v201, 1.0
    %v203 = vrsqrt.pop %v202
    %v204 = vmul.f32 %v202, %v203
    %vm205 = vcmp.eq.f32.partialorder %v202, inf
    %v206 = vsel %vm205, %v202, %v204
    %vm207 = vcmp.eq.f32.partialorder %v202, 0.0
    %v208 = vand.u32 %v202, 2147483648
    %v209 = vsel %vm207, %v208, %v206
    %v210 = vmul.f32 %v196, 0.87758255
    %v211 = vmul.f32 %v209, 0.47942555
    %v212 = vsub.f32 %v210, %v211
    %vm213 = vcmp.gt.f32.partialorder %v196, -0.87758255
    %v214 = vsub.f32 %v196, 0.23971277
    %v215 = vsel %vm213, %v212, %v214
    %v216 = vlaneseq
    %v217 = vand.u32 %v216, 127
    %s218 = smul.u32 0, 128
    %v219 = vstv %s218
    %v220 = vadd.s32 %v217, %v219
    %221 = vset.pattern.permute.xlu0 0
    %222 = vperm.xlu0 %221, %v32
    %v223 = vpop.permute.xlu0 %222
    %vm224 = vcmp.eq.s32.totalorder %v220, %v223
    %v225 = vsel %vm224, %v215, %v196
    %v226 = vmul.f32 %v225, 30.0
    %227 = vst [vmem:[#allocation2] sm:$0xff] %v226
    // Predicated region
    $region14: #{arcface_forward.1} parent=1 // pred_check
      _
    $region15: #{arcface_forward.1} parent=1 // pred_check_branch
      %229 = sbr.rel (0) target = $region17
    $region16: #{arcface_forward.1} parent=1 // pred_region
      %s231 = ssub.s32 128, 128
      %232 = vsyncadd [#allocation3], %s231
      %s234 = sshll.u32 [#allocation2], 4
      %s235 = int_to_ptr.vmem [resolvable:$true] %s234
      %237 = dma.vmem_to_hbm [thread:$0]  %s235, 128, %s3, [#allocation3]
    $region17: #{arcface_forward.1} parent=1 // pred_fallthru
      _
    // Predicated region
    $region18: #{arcface_forward.1} parent=1 // pred_check
      _
    $region19: #{arcface_forward.1} parent=1 // pred_check_branch
      %239 = sbr.rel (0) target = $region21
    $region20: #{arcface_forward.1} parent=1 // pred_region
      %240 = dma.done [#allocation3], 128
    $region21: #{arcface_forward.1} parent=1 // pred_fallthru
      _
    %241 = vsyncpa [#allocation3], 1

</llo_original>
